<compile_context>
chip_gen: v5e
topology: v5e:2x2
jax: 0.10.0
libtpu: 0.0.40
codegen_flags: <defaults>
</compile_context>

<pallas_src>
import functools
import math

import jax
import jax.numpy as jnp
from jax import lax
from jax.experimental import pallas as pl
from jax.experimental.pallas import tpu as pltpu


def _round_up(x, m):
    return (x + m - 1) // m * m


# ----------------------------------------------------------------------------
# Large-table path: manual HBM row-gather DMAs with cross-step prefetch.
# ----------------------------------------------------------------------------
def _gather_kernel(ids_ref, table_hbm, o_ref, row_buf, sems, *,
                   tokens_per_block, blocks_per_shard, scale, unroll):
    s = pl.program_id(0)                      # shard (parallel / megacore) axis
    i = pl.program_id(1)                      # block-within-shard (arbitrary)
    block = s * blocks_per_shard + i
    slot = lax.rem(i, 2)

    def issue_block(blk, dst_slot):
        base = blk * tokens_per_block

        def body(t, carry):
            tok = ids_ref[base + t]           # scalar read from SMEM
            pltpu.make_async_copy(
                table_hbm.at[pl.ds(tok, 1), :],
                row_buf.at[dst_slot, pl.ds(t, 1), :],
                sems.at[dst_slot],
            ).start()
            return carry

        lax.fori_loop(0, tokens_per_block, body, 0, unroll=unroll)

    def wait_block(dst_slot):
        def body(t, carry):
            # Source slice is shape-only (dst + sem define the wait amount);
            # shape kept identical to the started copies.
            pltpu.make_async_copy(
                table_hbm.at[pl.ds(0, 1), :],
                row_buf.at[dst_slot, pl.ds(t, 1), :],
                sems.at[dst_slot],
            ).wait()
            return carry

        lax.fori_loop(0, tokens_per_block, body, 0, unroll=unroll)

    # Prologue: prime the pipeline with this shard's first block. Runs once
    # per shard, so per-core grid sharding of the outer axis stays correct.
    @pl.when(i == 0)
    def _():
        issue_block(block, slot)

    # Cross-step prefetch: issue next block's row DMAs (ids read from SMEM)
    # *before* waiting on the current block's copies. Guarded so no DMA is
    # issued past the shard boundary (nothing is left un-waited).
    if blocks_per_shard > 1:
        @pl.when(i + 1 < blocks_per_shard)
        def _():
            issue_block(block + 1, lax.rem(i + 1, 2))

    wait_block(slot)

    # Scale in the table dtype (bf16 stays bf16 on v6e/v7x) and store the
    # whole (tokens_per_block, d_model) block lane-dense in one go.
    rows = row_buf[slot]
    o_ref[...] = (rows * jnp.asarray(scale, dtype=rows.dtype)).astype(o_ref.dtype)


# ----------------------------------------------------------------------------
# Small-table fast path: table resident in VMEM, no manual DMA machinery.
# ----------------------------------------------------------------------------
def _resident_table_kernel(ids_ref, table_ref, o_ref, *,
                           tokens_per_block, scale, unroll):
    base = pl.program_id(0) * tokens_per_block
    scale_c = jnp.asarray(scale, dtype=table_ref.dtype)

    def body(t, carry):
        tok = ids_ref[base + t]
        row = table_ref[pl.ds(tok, 1), :]        # dynamic sublane slice in VMEM
        o_ref[pl.ds(t, 1), :] = (row * scale_c).astype(o_ref.dtype)
        return carry

    lax.fori_loop(0, tokens_per_block, body, 0, unroll=unroll)


# ----------------------------------------------------------------------------
# Block-size heuristic: VMEM budget + sublane-multiple rounding.
# ----------------------------------------------------------------------------
def _block_heuristic(num_tokens, d_model, itemsize,
                     vmem_budget_bytes=16 << 20, max_tokens=1024):
    # Packed sublane multiple: 8 for 4-byte, 16 for 2-byte, 32 for 1-byte.
    sub = max(8, 32 // itemsize)
    # Live VMEM ~= 2x gather double buffer + 2x pipelined output buffer.
    per_token_bytes = 4 * d_model * itemsize
    t = max(sub, vmem_budget_bytes // max(per_token_bytes, 1))
    t = min(t, max_tokens)
    # Keep >= 2 blocks when there is enough work so prefetch/megacore help.
    half = _round_up(-(-num_tokens // 2), sub)
    t = min(t, max(half, sub))
    t = max(sub, (t // sub) * sub)
    return t


# ----------------------------------------------------------------------------
# Wrapper: dispatch, padding, grid setup.
# ----------------------------------------------------------------------------
def input_embedding(ids, table, *, force_gather=False):
    """ids: int array (any shape); table: (vocab_size, d_model).
    Returns ids.shape + (d_model,) = table[ids] * sqrt(d_model)."""
    vocab_size, d_model = table.shape
    scale = math.sqrt(float(d_model))
    itemsize = jnp.dtype(table.dtype).itemsize

    out_shape_full = ids.shape + (d_model,)
    ids_flat = jnp.clip(ids.reshape(-1).astype(jnp.int32), 0, vocab_size - 1)
    num_tokens = int(ids_flat.shape[0])

    tokens_per_block = _block_heuristic(num_tokens, d_model, itemsize)
    unroll = min(8, tokens_per_block)
    table_bytes = vocab_size * d_model * itemsize
    use_resident = (not force_gather) and table_bytes <= (2 << 20)

    cost = lambda padded: pl.CostEstimate(
        flops=padded * d_model,
        transcendentals=0,
        bytes_accessed=padded * d_model * itemsize * 2 + padded * 4)

    if use_resident:
        num_blocks = max(1, -(-num_tokens // tokens_per_block))
        padded_tokens = num_blocks * tokens_per_block
        if padded_tokens != num_tokens:
            ids_flat = jnp.pad(ids_flat, (0, padded_tokens - num_tokens))

        kernel = functools.partial(
            _resident_table_kernel, tokens_per_block=tokens_per_block,
            scale=scale, unroll=unroll)
        out = pl.pallas_call(
            kernel,
            out_shape=jax.ShapeDtypeStruct((padded_tokens, d_model), table.dtype),
            grid_spec=pltpu.PrefetchScalarGridSpec(
                num_scalar_prefetch=1,                       # token ids -> SMEM
                grid=(num_blocks,),
                in_specs=[pl.BlockSpec((vocab_size, d_model),
                                       lambda b, ids: (0, 0))],
                out_specs=pl.BlockSpec((tokens_per_block, d_model),
                                       lambda b, ids: (b, 0)),
            ),
            compiler_params=pltpu.CompilerParams(
                dimension_semantics=("parallel",),
                vmem_limit_bytes=32 * 1024 * 1024),
            cost_estimate=cost(padded_tokens),
        )(ids_flat, table)
    else:
        num_blocks = max(1, -(-num_tokens // tokens_per_block))
        num_shards = 2 if num_blocks >= 4 else 1
        num_blocks = _round_up(num_blocks, num_shards)
        blocks_per_shard = num_blocks // num_shards
        padded_tokens = num_blocks * tokens_per_block
        if padded_tokens != num_tokens:
            ids_flat = jnp.pad(ids_flat, (0, padded_tokens - num_tokens))
        # TODO(synk): pad rows still issue (harmless, trimmed) row-0 DMAs on the
        # last block; a pl.when(base+t < num_tokens) guard could skip them.

        kernel = functools.partial(
            _gather_kernel, tokens_per_block=tokens_per_block,
            blocks_per_shard=blocks_per_shard, scale=scale, unroll=unroll)
        out = pl.pallas_call(
            kernel,
            out_shape=jax.ShapeDtypeStruct((padded_tokens, d_model), table.dtype),
            grid_spec=pltpu.PrefetchScalarGridSpec(
                num_scalar_prefetch=1,                       # token ids -> SMEM
                grid=(num_shards, blocks_per_shard),
                in_specs=[pl.BlockSpec(memory_space=pl.ANY)],  # table stays in HBM
                out_specs=pl.BlockSpec(
                    (tokens_per_block, d_model),
                    lambda s, i, ids: (s * blocks_per_shard + i, 0)),
                scratch_shapes=[
                    pltpu.VMEM((2, tokens_per_block, d_model), table.dtype),
                    pltpu.SemaphoreType.DMA((2,)),           # one sem per buffer slot
                ],
            ),
            compiler_params=pltpu.CompilerParams(
                dimension_semantics=("parallel", "arbitrary"),
                vmem_limit_bytes=32 * 1024 * 1024),
            cost_estimate=cost(padded_tokens),
        )(ids_flat, table)

    return out[:num_tokens].reshape(out_shape_full)


# ----------------------------------------------------------------------------
# Module wrapper mirroring the PyTorch InputEmbedding.
# ----------------------------------------------------------------------------
class InputEmbedding:
    def __init__(self, d_model, vocab_size, key=None):
        self.d_model = d_model
        self.vocab_size = vocab_size
        if key is None:
            key = jax.random.PRNGKey(0)
        # nn.Embedding default init: N(0, 1).
        self.embedding = jax.random.normal(
            key, (vocab_size, d_model), dtype=jnp.float32)

    def __call__(self, x):
        return input_embedding(x, self.embedding)


# Pure-JAX reference for correctness checking (mirrors the PyTorch math).
def _reference_input_embedding(ids, table):
    return jnp.take(table, ids, axis=0) * math.sqrt(float(table.shape[1]))


if __name__ == "__main__":
    key = jax.random.PRNGKey(0)
    k_ids, k_tbl = jax.random.split(key)

    batch, seq = 2, 8
    d_model, vocab_size = 128, 64   # d_model multiple of 128 -> lane-dense stores

    emb = InputEmbedding(d_model, vocab_size, key=k_tbl)
    x = jax.random.randint(k_ids, (batch, seq), 0, vocab_size, dtype=jnp.int32)
    ref = _reference_input_embedding(x, emb.embedding)

    # Default dispatch (small table -> VMEM-resident fast path).
    out_fast = jax.block_until_ready(emb(x))
    # Large-table path: manual DMA gather with cross-step prefetch.
    out_gather = jax.block_until_ready(
        input_embedding(x, emb.embedding, force_gather=True))

    assert out_fast.shape == (batch, seq, d_model)
    assert out_gather.shape == (batch, seq, d_model)
    assert jnp.allclose(out_fast, ref, atol=1e-5, rtol=1e-5), "fast path mismatch"
    assert jnp.allclose(out_gather, ref, atol=1e-5, rtol=1e-5), "gather path mismatch"
    print("KERNEL_OK")
</pallas_src>

<mosaic_0001>
module attributes {stable_mosaic.version = 11 : i64} {
  func.func @_resident_table_kernel(%arg0: i32, %arg1: memref<16xi32, #tpu.memory_space<smem>>, %arg2: memref<64x128xf32, #tpu.memory_space<vmem>>, %arg3: memref<8x128xf32, #tpu.memory_space<vmem>>) attributes {dimension_semantics = [#tpu.dimension_semantics<parallel>], iteration_bounds = array<i64: 2>, scalar_prefetch = 1 : i64, scratch_operands = 0 : i64, tpu.core_type = #tpu.core_type<tc>, window_params = [{pipeline_mode = #tpu.pipeline_mode<synchronous>, transform_indices = @transform_0, window_bounds = array<i64: 64, 128>}, {transform_indices = @transform_1, window_bounds = array<i64: 8, 128>}]} {
    %c8_i32 = arith.constant 8 : i32
    %0 = arith.muli %arg0, %c8_i32 : i32
    %cst = arith.constant 11.3137083 : f32
    %c0_i32 = arith.constant 0 : i32
    %1 = arith.addi %0, %c0_i32 : i32
    %2 = arith.index_cast %1 : i32 to index
    %3 = memref.load %arg1[%2] : memref<16xi32, #tpu.memory_space<smem>>
    %4 = arith.index_cast %3 : i32 to index
    %c0 = arith.constant 0 : index
    %5 = vector.load %arg2[%4, %c0] : memref<64x128xf32, #tpu.memory_space<vmem>>, vector<1x128xf32>
    %6 = vector.broadcast %cst : f32 to vector<1x128xf32>
    %7 = arith.mulf %5, %6 : vector<1x128xf32>
    %8 = arith.index_cast %c0_i32 : i32 to index
    %c0_0 = arith.constant 0 : index
    %9 = vector.load %arg3[%8, %c0_0] : memref<8x128xf32, #tpu.memory_space<vmem>>, vector<1x128xf32>
    tpu.vector_store %arg3[%8, %c0_0], %7 {strides = array<i32>} : memref<8x128xf32, #tpu.memory_space<vmem>>, vector<1x128xf32>,
    %c1_i32 = arith.constant 1 : i32
    %10 = arith.addi %0, %c1_i32 : i32
    %11 = arith.index_cast %10 : i32 to index
    %12 = memref.load %arg1[%11] : memref<16xi32, #tpu.memory_space<smem>>
    %13 = arith.index_cast %12 : i32 to index
    %c0_1 = arith.constant 0 : index
    %14 = vector.load %arg2[%13, %c0_1] : memref<64x128xf32, #tpu.memory_space<vmem>>, vector<1x128xf32>
    %15 = vector.broadcast %cst : f32 to vector<1x128xf32>
    %16 = arith.mulf %14, %15 : vector<1x128xf32>
    %17 = arith.index_cast %c1_i32 : i32 to index
    %c0_2 = arith.constant 0 : index
    %18 = vector.load %arg3[%17, %c0_2] : memref<8x128xf32, #tpu.memory_space<vmem>>, vector<1x128xf32>
    tpu.vector_store %arg3[%17, %c0_2], %16 {strides = array<i32>} : memref<8x128xf32, #tpu.memory_space<vmem>>, vector<1x128xf32>,
    %c2_i32 = arith.constant 2 : i32
    %19 = arith.addi %0, %c2_i32 : i32
    %20 = arith.index_cast %19 : i32 to index
    %21 = memref.load %arg1[%20] : memref<16xi32, #tpu.memory_space<smem>>
    %22 = arith.index_cast %21 : i32 to index
    %c0_3 = arith.constant 0 : index
    %23 = vector.load %arg2[%22, %c0_3] : memref<64x128xf32, #tpu.memory_space<vmem>>, vector<1x128xf32>
    %24 = vector.broadcast %cst : f32 to vector<1x128xf32>
    %25 = arith.mulf %23, %24 : vector<1x128xf32>
    %26 = arith.index_cast %c2_i32 : i32 to index
    %c0_4 = arith.constant 0 : index
    %27 = vector.load %arg3[%26, %c0_4] : memref<8x128xf32, #tpu.memory_space<vmem>>, vector<1x128xf32>
    tpu.vector_store %arg3[%26, %c0_4], %25 {strides = array<i32>} : memref<8x128xf32, #tpu.memory_space<vmem>>, vector<1x128xf32>,
    %c3_i32 = arith.constant 3 : i32
    %28 = arith.addi %0, %c3_i32 : i32
    %29 = arith.index_cast %28 : i32 to index
    %30 = memref.load %arg1[%29] : memref<16xi32, #tpu.memory_space<smem>>
    %31 = arith.index_cast %30 : i32 to index
    %c0_5 = arith.constant 0 : index
    %32 = vector.load %arg2[%31, %c0_5] : memref<64x128xf32, #tpu.memory_space<vmem>>, vector<1x128xf32>
    %33 = vector.broadcast %cst : f32 to vector<1x128xf32>
    %34 = arith.mulf %32, %33 : vector<1x128xf32>
    %35 = arith.index_cast %c3_i32 : i32 to index
    %c0_6 = arith.constant 0 : index
    %36 = vector.load %arg3[%35, %c0_6] : memref<8x128xf32, #tpu.memory_space<vmem>>, vector<1x128xf32>
    tpu.vector_store %arg3[%35, %c0_6], %34 {strides = array<i32>} : memref<8x128xf32, #tpu.memory_space<vmem>>, vector<1x128xf32>,
    %c4_i32 = arith.constant 4 : i32
    %37 = arith.addi %0, %c4_i32 : i32
    %38 = arith.index_cast %37 : i32 to index
    %39 = memref.load %arg1[%38] : memref<16xi32, #tpu.memory_space<smem>>
    %40 = arith.index_cast %39 : i32 to index
    %c0_7 = arith.constant 0 : index
    %41 = vector.load %arg2[%40, %c0_7] : memref<64x128xf32, #tpu.memory_space<vmem>>, vector<1x128xf32>
    %42 = vector.broadcast %cst : f32 to vector<1x128xf32>
    %43 = arith.mulf %41, %42 : vector<1x128xf32>
    %44 = arith.index_cast %c4_i32 : i32 to index
    %c0_8 = arith.constant 0 : index
    %45 = vector.load %arg3[%44, %c0_8] : memref<8x128xf32, #tpu.memory_space<vmem>>, vector<1x128xf32>
    tpu.vector_store %arg3[%44, %c0_8], %43 {strides = array<i32>} : memref<8x128xf32, #tpu.memory_space<vmem>>, vector<1x128xf32>,
    %c5_i32 = arith.constant 5 : i32
    %46 = arith.addi %0, %c5_i32 : i32
    %47 = arith.index_cast %46 : i32 to index
    %48 = memref.load %arg1[%47] : memref<16xi32, #tpu.memory_space<smem>>
    %49 = arith.index_cast %48 : i32 to index
    %c0_9 = arith.constant 0 : index
    %50 = vector.load %arg2[%49, %c0_9] : memref<64x128xf32, #tpu.memory_space<vmem>>, vector<1x128xf32>
    %51 = vector.broadcast %cst : f32 to vector<1x128xf32>
    %52 = arith.mulf %50, %51 : vector<1x128xf32>
    %53 = arith.index_cast %c5_i32 : i32 to index
    %c0_10 = arith.constant 0 : index
    %54 = vector.load %arg3[%53, %c0_10] : memref<8x128xf32, #tpu.memory_space<vmem>>, vector<1x128xf32>
    tpu.vector_store %arg3[%53, %c0_10], %52 {strides = array<i32>} : memref<8x128xf32, #tpu.memory_space<vmem>>, vector<1x128xf32>,
    %c6_i32 = arith.constant 6 : i32
    %55 = arith.addi %0, %c6_i32 : i32
    %56 = arith.index_cast %55 : i32 to index
    %57 = memref.load %arg1[%56] : memref<16xi32, #tpu.memory_space<smem>>
    %58 = arith.index_cast %57 : i32 to index
    %c0_11 = arith.constant 0 : index
    %59 = vector.load %arg2[%58, %c0_11] : memref<64x128xf32, #tpu.memory_space<vmem>>, vector<1x128xf32>
    %60 = vector.broadcast %cst : f32 to vector<1x128xf32>
    %61 = arith.mulf %59, %60 : vector<1x128xf32>
    %62 = arith.index_cast %c6_i32 : i32 to index
    %c0_12 = arith.constant 0 : index
    %63 = vector.load %arg3[%62, %c0_12] : memref<8x128xf32, #tpu.memory_space<vmem>>, vector<1x128xf32>
    tpu.vector_store %arg3[%62, %c0_12], %61 {strides = array<i32>} : memref<8x128xf32, #tpu.memory_space<vmem>>, vector<1x128xf32>,
    %c7_i32 = arith.constant 7 : i32
    %64 = arith.addi %0, %c7_i32 : i32
    %65 = arith.index_cast %64 : i32 to index
    %66 = memref.load %arg1[%65] : memref<16xi32, #tpu.memory_space<smem>>
    %67 = arith.index_cast %66 : i32 to index
    %c0_13 = arith.constant 0 : index
    %68 = vector.load %arg2[%67, %c0_13] : memref<64x128xf32, #tpu.memory_space<vmem>>, vector<1x128xf32>
    %69 = vector.broadcast %cst : f32 to vector<1x128xf32>
    %70 = arith.mulf %68, %69 : vector<1x128xf32>
    %71 = arith.index_cast %c7_i32 : i32 to index
    %c0_14 = arith.constant 0 : index
    %72 = vector.load %arg3[%71, %c0_14] : memref<8x128xf32, #tpu.memory_space<vmem>>, vector<1x128xf32>
    tpu.vector_store %arg3[%71, %c0_14], %70 {strides = array<i32>} : memref<8x128xf32, #tpu.memory_space<vmem>>, vector<1x128xf32>,
    %c8_i32_15 = arith.constant 8 : i32
    return
  }
  func.func @transform_0(%arg0: i32, %arg1: memref<16xi32, #tpu.memory_space<smem>>) -> (i32, i32) {
    %c0_i32 = arith.constant 0 : i32
    %c0_i32_0 = arith.constant 0 : i32
    %c0_i32_1 = arith.constant 0 : i32
    return %c0_i32, %c0_i32_0 : i32, i32
  }
  func.func @transform_1(%arg0: i32, %arg1: memref<16xi32, #tpu.memory_space<smem>>) -> (i32, i32) {
    %c0_i32 = arith.constant 0 : i32
    %c0_i32_0 = arith.constant 0 : i32
    return %arg0, %c0_i32 : i32, i32
  }
}

</mosaic_0001>

<llo_original>
// kernel: tpu_custom_call.1
$region0: #{tpu_custom_call.1}
  #allocation0 [shape = 'u32[]', space=smem, size = 0x4, offset = 0x4, fixed_abs, tag = 'smem constant byte address 0x4 - core index']
  #allocation1 [shape = 'u32[72,128]{1,0:T(1,128)}', space=vmem, size = 0x9000, scoped, tag = 'internal scratch']
  #allocation2 [shape = 's32[1]{0}', space=sflag, size = 0x4, scoped, tag = 'scoped memory for tpu_custom_call.1']
  #allocation3 [shape = 'u8[512]{0}', space=smem, size = 0x200, scoped, tag = 'prefetched SMEM operand 0']
  %s0 = inlined_call_operand.hbm [shape: s32[16], index: 0, kind: input, shape index: {}]
  %s1 = inlined_call_operand.hbm [shape: f32[64,128], index: 1, kind: input, shape index: {}]
  %s2 = inlined_call_operand.hbm [shape: f32[16,128], index: 2, kind: output, shape index: {}]
  %s3 = sld [smem:[#allocation0]]
  $region41: #{tpu_custom_call.1} parent=0
    _
  %s5 = ssub.s32 1, %s3
  %s6 = scalar_select 0, %s5, %s3
  %s8 = sshll.u32 %s0, 4
  %s9 = int_to_ptr.hbm [resolvable:$true] %s8
  %11 = dma.hbm_to_smem %s9, 16, [#allocation3], [#allocation2]
  %13 = dma.done [#allocation2], 16
  %14 = sfence
  $region1: #{tpu_custom_call.1} parent=0
    #allocation4 [shape = 'u8[32768]{0}', space=vmem, size = 0x8000, scoped, tag = 'input window, operand 1, single buffered']
    #allocation5 [shape = 's32[2]{0}', space=sflag, size = 0x8, scoped, tag = 'scoped memory for tpu_custom_call.1']
    #allocation6 [shape = 's32[2]{0}', space=sflag, size = 0x8, scoped, tag = 'scoped memory for tpu_custom_call.1']
    #allocation7 [shape = 'u8[8192]{0}', space=vmem, size = 0x2000, scoped, tag = 'output window, operand 0']
    %15 = vsyncpa [#allocation5], 0
    %16 = vsyncpa [#allocation6], 0
    %s17 = scalar_lea.sflag [#allocation6], 1
    %18 = vsyncpa %s17, 0
    loop: start=0, step=1, limit=4
    $region2: #{tpu_custom_call.1} parent=1 // loop_pre_header
      _
    $region3: #{tpu_custom_call.1} parent=1 // loop_header
      %s20 = sphi 0, %s24
      %p21 = scmp.ge.s32.totalorder %s20, 4
      %s28 = sphi 0, %s28
      %s30 = sphi 0, %s28
      %s31 = sphi 0, %s30
      %s45 = sphi 0, %s31
      %s51 = sphi 0, %s53
      %s54 = sphi 0, %s51
      %s55 = sphi 0, %s54
      %s71 = sphi 0, %s55
    $region4: #{tpu_custom_call.1} parent=1 // loop_header_branch
      %23 = sbr.rel (%p21) target = $region8
    $region5: #{tpu_custom_call.1} parent=1 // loop_body
      %s25 = ssub.s32 %s20, 1
      %s26 = ssub.s32 %s20, 2
      %s27 = sadd.s32 %s20, 1
      %s29 = sadd.s32 %s28, 1
      %p32 = scmp.eq.s32.totalorder %s20, 1
      %p33 = scmp.ne.s32.totalorder %s28, %s30
      %p34 = scmp.eq.s32.totalorder %s20, 0
      %p35 = por %p33, %p34
      %p36 = scmp.ne.s32.totalorder %s28, %s30
      %p37 = scmp.eq.s32.totalorder %s25, 1
      %p38 = por %p36, %p37
      %p39 = scmp.ne.s32.totalorder %s30, %s31
      %p40 = scmp.eq.s32.totalorder %s25, 0
      %p41 = por %p39, %p40
      %p42 = scmp.ne.s32.totalorder %s30, %s31
      %p43 = scmp.eq.s32.totalorder %s26, 1
      %p44 = por %p42, %p43
      %p46 = scmp.ne.s32.totalorder %s31, %s45
      %p47 = scmp.eq.s32.totalorder %s26, 0
      %p48 = por %p46, %p47
      %s49 = ssub.s32 %s20, %s27
      %p50 = scmp.eq.s32.totalorder %s49, 0
      %s52 = sadd.s32 %s51, 1
      %s53 = scalar_select %p50, %s51, %s52
      %p56 = pneg %p50
      %p57 = scmp.eq.s32.totalorder %s20, 1
      %p58 = por %p56, %p57
      %p59 = scmp.ne.s32.totalorder %s51, %s54
      %p60 = scmp.eq.s32.totalorder %s20, 0
      %p61 = por %p59, %p60
      %p62 = scmp.ne.s32.totalorder %s51, %s54
      %p63 = scmp.eq.s32.totalorder %s25, 1
      %p64 = por %p62, %p63
      %p65 = scmp.ne.s32.totalorder %s54, %s55
      %p66 = scmp.eq.s32.totalorder %s25, 0
      %p67 = por %p65, %p66
      %p68 = scmp.ne.s32.totalorder %s54, %s55
      %p69 = scmp.eq.s32.totalorder %s26, 1
      %p70 = por %p68, %p69
      %p72 = scmp.ne.s32.totalorder %s55, %s71
      %p73 = scmp.eq.s32.totalorder %s26, 0
      %p74 = por %p72, %p73
      %p75 = scmp.le.s32.totalorder 1, %s20
      %p76 = scmp.lt.s32.totalorder %s20, 3
      %p77 = pnand %p75, %p76
      %p78 = pneg %p77
      // Predicated region
      $region9: #{tpu_custom_call.1} parent=5 // pred_check
        _
      $region10: #{tpu_custom_call.1} parent=5 // pred_check_branch
        %80 = sbr.rel (%p77) target = $region12
      $region11: #{tpu_custom_call.1} parent=5 // pred_region
        %s81 = ssub.s32 %s20, 1
        // Predicated region
        $region13: #{tpu_custom_call.1} parent=11 // pred_check
          %p82 = pneg %p41
        $region14: #{tpu_custom_call.1} parent=11 // pred_check_branch
          %84 = sbr.rel (%p82) target = $region16
        $region15: #{tpu_custom_call.1} parent=11 // pred_region
          %86 = vsyncadd [#allocation5], 0
          %s87 = sshll.u32 %s1, 4
          %s88 = int_to_ptr.hbm [resolvable:$true] %s87
          %s89 = sshll.u32 [#allocation4], 4
          %s90 = int_to_ptr.vmem [resolvable:$true] %s89
          %95 = dma.hbm_to_vmem [thread:$0]  %s88, 1024, %s90, [#allocation5], 128, 128, 8
        $region16: #{tpu_custom_call.1} parent=11 // pred_fallthru
          _
      $region12: #{tpu_custom_call.1} parent=5 // pred_fallthru
        _
      %p96 = scmp.lt.s32.totalorder %s20, 2
      // Predicated region
      $region17: #{tpu_custom_call.1} parent=5 // pred_check
        %p97 = pneg %p96
      $region18: #{tpu_custom_call.1} parent=5 // pred_check_branch
        %99 = sbr.rel (%p97) target = $region20
      $region19: #{tpu_custom_call.1} parent=5 // pred_region
        _
      $region20: #{tpu_custom_call.1} parent=5 // pred_fallthru
        _
      %p100 = scmp.le.s32.totalorder 1, %s20
      %p101 = scmp.lt.s32.totalorder %s20, 3
      %p102 = pnand %p100, %p101
      %p103 = pneg %p102
      // Predicated region
      $region21: #{tpu_custom_call.1} parent=5 // pred_check
        _
      $region22: #{tpu_custom_call.1} parent=5 // pred_check_branch
        %105 = sbr.rel (%p102) target = $region24
      $region23: #{tpu_custom_call.1} parent=5 // pred_region
        %s106 = ssub.s32 %s20, 1
        // Predicated region
        $region25: #{tpu_custom_call.1} parent=23 // pred_check
          %p107 = pneg %p41
        $region26: #{tpu_custom_call.1} parent=23 // pred_check_branch
          %109 = sbr.rel (%p107) target = $region28
        $region27: #{tpu_custom_call.1} parent=23 // pred_region
          %111 = dma.done [#allocation5], 1024
        $region28: #{tpu_custom_call.1} parent=23 // pred_fallthru
          _
        %p112 = pneg %p41
        %p113 = pneg %p38
        %p114 = pneg %p67
        %p115 = pneg %p64
        %s116 = sand.u32 %s54, 1
        %s117 = scalar_lea.sflag [#allocation6], %s116
        %s118 = sand.u32 %s54, 1
        %s119 = smul.addr %s118, 8
        %s120 = scalar_lea.vmem [#allocation7], %s119
        %s121 = smul.u32 %s25, 8
        %s122 = sld [smem:[#allocation3 + %s121]]
        %s123 = scalar_lea.vmem [#allocation4], %s122
        %v124 = vld [vmem:[%s123] sm:$0x1]
        %v125 = vmul.f32 %v124, 11.313708
        %126 = vst [vmem:[%s120] sm:$0x1] %v125
        %s127 = sadd.s32 %s121, 1
        %s128 = sld [smem:[#allocation3 + %s127]]
        %s129 = scalar_lea.vmem [#allocation4], %s128
        %v130 = vld [vmem:[%s129] sm:$0x1]
        %v131 = vmul.f32 %v130, 11.313708
        %132 = vst [vmem:[%s120 + $0x1] sm:$0x1] %v131
        %s133 = sadd.s32 %s121, 2
        %s134 = sld [smem:[#allocation3 + %s133]]
        %s135 = scalar_lea.vmem [#allocation4], %s134
        %v136 = vld [vmem:[%s135] sm:$0x1]
        %v137 = vmul.f32 %v136, 11.313708
        %138 = vst [vmem:[%s120 + $0x2] sm:$0x1] %v137
        %s139 = sadd.s32 %s121, 3
        %s140 = sld [smem:[#allocation3 + %s139]]
        %s141 = scalar_lea.vmem [#allocation4], %s140
        %v142 = vld [vmem:[%s141] sm:$0x1]
        %v143 = vmul.f32 %v142, 11.313708
        %144 = vst [vmem:[%s120 + $0x3] sm:$0x1] %v143
        %s145 = sadd.s32 %s121, 4
        %s146 = sld [smem:[#allocation3 + %s145]]
        %s147 = scalar_lea.vmem [#allocation4], %s146
        %v148 = vld [vmem:[%s147] sm:$0x1]
        %v149 = vmul.f32 %v148, 11.313708
        %150 = vst [vmem:[%s120 + $0x4] sm:$0x1] %v149
        %s151 = sadd.s32 %s121, 5
        %s152 = sld [smem:[#allocation3 + %s151]]
        %s153 = scalar_lea.vmem [#allocation4], %s152
        %v154 = vld [vmem:[%s153] sm:$0x1]
        %v155 = vmul.f32 %v154, 11.313708
        %156 = vst [vmem:[%s120 + $0x5] sm:$0x1] %v155
        %s157 = sadd.s32 %s121, 6
        %s158 = sld [smem:[#allocation3 + %s157]]
        %s159 = scalar_lea.vmem [#allocation4], %s158
        %v160 = vld [vmem:[%s159] sm:$0x1]
        %v161 = vmul.f32 %v160, 11.313708
        %162 = vst [vmem:[%s120 + $0x6] sm:$0x1] %v161
        %s163 = sadd.s32 %s121, 7
        %s164 = sld [smem:[#allocation3 + %s163]]
        %s165 = scalar_lea.vmem [#allocation4], %s164
        %v166 = vld [vmem:[%s165] sm:$0x1]
        %v167 = vmul.f32 %v166, 11.313708
        %168 = vst [vmem:[%s120 + $0x7] sm:$0x1] %v167
        %s169 = sand.u32 %s54, 1
        %s170 = scalar_lea.sflag [#allocation6], %s169
        %s171 = sand.u32 %s54, 1
        %s172 = smul.addr %s171, 8
        %s173 = scalar_lea.vmem [#allocation7], %s172
        // Predicated region
        $region29: #{tpu_custom_call.1} parent=23 // pred_check
          %p174 = pneg %p64
        $region30: #{tpu_custom_call.1} parent=23 // pred_check_branch
          %176 = sbr.rel (%p174) target = $region32
        $region31: #{tpu_custom_call.1} parent=23 // pred_region
          %178 = vsyncadd %s170, 0
          %s179 = smul.addr %s25, 8
          %s180 = scalar_lea.hbm %s2, %s179
          %s182 = sshll.u32 %s173, 4
          %s183 = int_to_ptr.vmem [resolvable:$true] %s182
          %s184 = sshll.u32 %s180, 4
          %s185 = int_to_ptr.hbm [resolvable:$true] %s184
          %187 = dma.vmem_to_hbm [thread:$0]  %s183, 128, %s185, %s170
        $region32: #{tpu_custom_call.1} parent=23 // pred_fallthru
          _
      $region24: #{tpu_custom_call.1} parent=5 // pred_fallthru
        _
      %p188 = scmp.le.s32.totalorder 2, %s20
      // Predicated region
      $region33: #{tpu_custom_call.1} parent=5 // pred_check
        %p189 = pneg %p188
      $region34: #{tpu_custom_call.1} parent=5 // pred_check_branch
        %191 = sbr.rel (%p189) target = $region36
      $region35: #{tpu_custom_call.1} parent=5 // pred_region
        %s192 = ssub.s32 %s20, 2
        // Predicated region
        $region37: #{tpu_custom_call.1} parent=35 // pred_check
          %p193 = pneg %p70
        $region38: #{tpu_custom_call.1} parent=35 // pred_check_branch
          %195 = sbr.rel (%p193) target = $region40
        $region39: #{tpu_custom_call.1} parent=35 // pred_region
          %s196 = sand.u32 %s55, 1
          %s197 = scalar_lea.sflag [#allocation6], %s196
          %s198 = sand.u32 %s55, 1
          %s199 = smul.addr %s198, 8
          %s200 = scalar_lea.vmem [#allocation7], %s199
          %202 = dma.done %s197, 128
        $region40: #{tpu_custom_call.1} parent=35 // pred_fallthru
          _
      $region36: #{tpu_custom_call.1} parent=5 // pred_fallthru
        _
    $region6: #{tpu_custom_call.1} parent=1 // loop_footer
      %s24 = sadd.s32 1, %s20
    $region7: #{tpu_custom_call.1} parent=1 // loop_footer_branch
      %19 = sbr.rel target = $region3
    $region8: #{tpu_custom_call.1} parent=1 // loop_exit
      _
    %203 = vsyncpa [#allocation5], 1
    %s204 = scalar_lea.sflag [#allocation5], 1
    %205 = vsyncpa %s204, 1
    %206 = vsyncpa [#allocation6], 1
    %s207 = scalar_lea.sflag [#allocation6], 1
    %208 = vsyncpa %s207, 1

</llo_original>
